<compile_context>
chip_gen: v7x
topology: tpu7x:2x2x1
jax: 0.10.0
libtpu: 0.0.40
codegen_flags: <defaults>
</compile_context>

<pallas_src>
import functools

import jax
import jax.numpy as jnp
import numpy as np
from jax.experimental import pallas as pl
from jax.experimental.pallas import tpu as pltpu


# ----------------------------------------------------------------------------
# Kernels
# ----------------------------------------------------------------------------
def _packed_lut_kernel(packed_ref, x_ref, o_ref, *, bits, log2_epw, num_words):
    """out = (packed[x // entries_per_word] >> (bits * (x % epw))) & mask."""
    # packed_ref: SMEM (num_words,) int32  (bit-packed lookup table)
    # x_ref:      VMEM (TB, N)       int32 labels
    # o_ref:      VMEM (TB, N)       int32 mapped labels
    x = x_ref[...]
    epw_mask = (1 << log2_epw) - 1          # entries_per_word - 1 (power of two)
    val_mask = jnp.uint32((1 << bits) - 1)

    bit_off = ((x & epw_mask) * bits).astype(jnp.uint32)

    if num_words == 1:
        word = jnp.full(x.shape, packed_ref[0], dtype=jnp.int32)
    else:
        word_idx = x >> log2_epw
        word = jnp.full(x.shape, packed_ref[0], dtype=jnp.int32)
        for w in range(1, num_words):
            word = jnp.where(word_idx == w, packed_ref[w], word)

    word_u = pltpu.bitcast(word, jnp.uint32)
    val = jnp.right_shift(word_u, bit_off) & val_mask
    o_ref[...] = val.astype(jnp.int32)


def _select_kernel(mapping_ref, x_ref, o_ref, *, num_classes):
    """Fallback: compare/select chain over the raw table (general values)."""
    # mapping_ref: SMEM (num_classes,) int32
    x = x_ref[...]
    out = jnp.full(x.shape, mapping_ref[0], dtype=jnp.int32)
    if num_classes <= 16:
        for c in range(1, num_classes):
            out = jnp.where(x == c, mapping_ref[c], out)
    else:
        def body(c, acc):
            return jnp.where(x == c, mapping_ref[c], acc)
        out = jax.lax.fori_loop(1, num_classes, body, out, unroll=True)
    o_ref[...] = out


# ----------------------------------------------------------------------------
# Host-side packing helper
# ----------------------------------------------------------------------------
def _try_pack_mapping(domain_mapping):
    """Pack the table into int32 words if values are small non-negative ints.

    Returns (packed_int32_array, bits_per_entry, log2_entries_per_word,
    num_words) or None if packing is not applicable (traced table, negative
    or large values).
    """
    try:
        if isinstance(domain_mapping, jax.core.Tracer):
            return None
        vals = np.asarray(jax.device_get(domain_mapping)).astype(np.int64)
    except Exception:  # traced / non-concrete table
        return None

    num_classes = int(vals.shape[0])
    if num_classes == 0 or int(vals.min()) < 0:
        return None

    needed = max(1, int(vals.max()).bit_length())
    bits = 1
    while bits < needed:
        bits *= 2
    if bits > 16:          # packing buys nothing; use the select fallback
        return None

    entries_per_word = 32 // bits           # power of two
    num_words = -(-num_classes // entries_per_word)
    packed = np.zeros((num_words,), dtype=np.uint64)
    for c in range(num_classes):
        shift = (c % entries_per_word) * bits
        packed[c // entries_per_word] |= np.uint64(int(vals[c])) << np.uint64(shift)
    packed_i32 = packed.astype(np.uint32).view(np.int32)

    log2_epw = int(entries_per_word).bit_length() - 1
    return jnp.asarray(packed_i32), bits, log2_epw, num_words


# ----------------------------------------------------------------------------
# Wrapper
# ----------------------------------------------------------------------------
def to_domain_label(x, domain_mapping):
    """x: int32 array (B, N); domain_mapping: int32 array (C,)."""
    assert x.ndim == 2, "expected 2-D label tensor (B, N)"
    assert x.dtype == jnp.int32
    domain_mapping = jnp.asarray(domain_mapping, dtype=jnp.int32)
    num_classes = int(domain_mapping.shape[0])
    B, N = x.shape

    # Row tile: multiple of 8 (or the full row dim), ~4 MiB per input buffer,
    # so the auto double-buffered pipeline fits comfortably in VMEM on
    # v5e/v6e (128 MiB) and v7x (64 MiB).  Last dim stays full -> lane-dense,
    # unmasked stores when N is a multiple of 128.
    bytes_per_row = N * 4
    rows_cap = (4 * 1024 * 1024) // max(1, bytes_per_row)
    rows_cap = max(8, min(512, (rows_cap // 8) * 8))
    tb = B if B <= rows_cap else rows_cap
    grid = (pl.cdiv(B, tb),)

    packed_info = _try_pack_mapping(domain_mapping)
    if packed_info is not None:
        table, bits, log2_epw, num_words = packed_info
        kernel = functools.partial(
            _packed_lut_kernel, bits=bits, log2_epw=log2_epw, num_words=num_words
        )
    else:
        table = domain_mapping
        kernel = functools.partial(_select_kernel, num_classes=num_classes)

    return pl.pallas_call(
        kernel,
        out_shape=jax.ShapeDtypeStruct((B, N), jnp.int32),
        grid_spec=pltpu.PrefetchScalarGridSpec(
            num_scalar_prefetch=0,
            grid=grid,
            in_specs=[
                # lookup table (packed or raw) lives in SMEM -> cheap scalar reads
                pl.BlockSpec(memory_space=pltpu.MemorySpace.SMEM),
                pl.BlockSpec((tb, N), lambda i: (i, 0)),
            ],
            out_specs=pl.BlockSpec((tb, N), lambda i: (i, 0)),
        ),
        compiler_params=pltpu.CompilerParams(
            # Row blocks are independent -> megacore sharding on v7x.
            dimension_semantics=("parallel",)
        ),
    )(table, x)


# ----------------------------------------------------------------------------
# Self-test
# ----------------------------------------------------------------------------
if __name__ == "__main__":
    key = jax.random.PRNGKey(0)

    # --- Case 1: module-sized example (16 classes -> 4 domains, single word)
    k_map, k_x, key = jax.random.split(key, 3)
    num_classes, num_domains = 16, 4
    B, N = 2, 128
    domain_mapping = jax.random.randint(
        k_map, (num_classes,), 0, num_domains, dtype=jnp.int32
    )
    x = jax.random.randint(k_x, (B, N), 0, num_classes, dtype=jnp.int32)
    out = jax.block_until_ready(to_domain_label(x, domain_mapping))
    ref = domain_mapping[x]
    assert out.shape == x.shape and out.dtype == jnp.int32
    assert bool(jnp.all(out == ref))

    # --- Case 2: multi-word packed path + tiled rows (40 classes, B=64)
    k_map2, k_x2, key = jax.random.split(key, 3)
    num_classes2 = 40
    domain_mapping2 = jax.random.randint(
        k_map2, (num_classes2,), 0, 4, dtype=jnp.int32
    )
    x2 = jax.random.randint(k_x2, (64, 256), 0, num_classes2, dtype=jnp.int32)
    out2 = jax.block_until_ready(to_domain_label(x2, domain_mapping2))
    assert bool(jnp.all(out2 == domain_mapping2[x2]))

    # --- Case 3: values too large to bit-pack -> compare/select fallback
    k_x3, _ = jax.random.split(key)
    domain_mapping3 = jnp.array([70000, 3, 123456, 7, 0, 99999], dtype=jnp.int32)
    x3 = jax.random.randint(k_x3, (2, 128), 0, 6, dtype=jnp.int32)
    out3 = jax.block_until_ready(to_domain_label(x3, domain_mapping3))
    assert bool(jnp.all(out3 == domain_mapping3[x3]))

    print("KERNEL_OK")
</pallas_src>

<mosaic_0001>
module attributes {stable_mosaic.version = 11 : i64} {
  func.func @_packed_lut_kernel(%arg0: i32, %arg1: memref<1xi32, #tpu.memory_space<smem>>, %arg2: memref<2x128xi32, #tpu.memory_space<vmem>>, %arg3: memref<2x128xi32, #tpu.memory_space<vmem>>) attributes {dimension_semantics = [#tpu.dimension_semantics<parallel>], iteration_bounds = array<i64: 1>, scalar_prefetch = 0 : i64, scratch_operands = 0 : i64, tpu.core_type = #tpu.core_type<tc>, window_params = [{transform_indices = @transform_0, window_bounds = array<i64: 1>}, {transform_indices = @transform_1, window_bounds = array<i64: 2, 128>}, {transform_indices = @transform_2, window_bounds = array<i64: 2, 128>}]} {
    %c0 = arith.constant 0 : index
    %c0_0 = arith.constant 0 : index
    %0 = vector.load %arg2[%c0, %c0_0] : memref<2x128xi32, #tpu.memory_space<vmem>>, vector<2x128xi32>
    %c15_i32 = arith.constant 15 : i32
    %1 = vector.broadcast %c15_i32 : i32 to vector<2x128xi32>
    %2 = arith.andi %0, %1 : vector<2x128xi32>
    %c2_i32 = arith.constant 2 : i32
    %3 = vector.broadcast %c2_i32 : i32 to vector<2x128xi32>
    %4 = arith.muli %2, %3 : vector<2x128xi32>
    %c0_1 = arith.constant 0 : index
    %5 = memref.load %arg1[%c0_1] : memref<1xi32, #tpu.memory_space<smem>>
    %6 = vector.broadcast %5 : i32 to vector<2x128xi32>
    %7 = tpu.bitcast %6 : vector<2x128xi32> -> vector<2x128xi32>
    %8 = arith.shrui %7, %4 : vector<2x128xi32>
    %c3_i32 = arith.constant 3 : i32
    %9 = vector.broadcast %c3_i32 : i32 to vector<2x128xi32>
    %10 = arith.andi %8, %9 : vector<2x128xi32>
    %c0_2 = arith.constant 0 : index
    %c0_3 = arith.constant 0 : index
    %11 = vector.load %arg3[%c0_2, %c0_3] : memref<2x128xi32, #tpu.memory_space<vmem>>, vector<2x128xi32>
    tpu.vector_store %arg3[%c0_2, %c0_3], %10 {strides = array<i32>} : memref<2x128xi32, #tpu.memory_space<vmem>>, vector<2x128xi32>,
    return
  }
  func.func @transform_0(%arg0: i32) -> i32 {
    %c0_i32 = arith.constant 0 : i32
    %c0_i32_0 = arith.constant 0 : i32
    return %c0_i32 : i32
  }
  func.func @transform_1(%arg0: i32) -> (i32, i32) {
    %c0_i32 = arith.constant 0 : i32
    %c0_i32_0 = arith.constant 0 : i32
    return %arg0, %c0_i32 : i32, i32
  }
  func.func @transform_2(%arg0: i32) -> (i32, i32) {
    %c0_i32 = arith.constant 0 : i32
    %c0_i32_0 = arith.constant 0 : i32
    return %arg0, %c0_i32 : i32, i32
  }
}

</mosaic_0001>

<llo_original>
// kernel: tpu_custom_call.1
$region0: #{tpu_custom_call.1}
  #allocation0 [shape = 'u32[]', space=smem, size = 0x4, offset = 0x4, fixed_abs, tag = 'smem constant byte address 0x4 - core index']
  #allocation1 [shape = 'u32[144,128]{1,0:T(1,128)}', space=vmem, size = 0x12000, scoped, tag = 'internal scratch']
  #allocation2 [shape = 's32[1]{0:T(128)S(6)}', space=smem, size = 0x200, scoped, tag = 'scoped memory for tpu_custom_call.1']
  %s0 = inlined_call_operand.<no memory space> [shape: s32[1], index: 0, kind: input, shape index: {}]
  %s1 = inlined_call_operand.vmem [shape: s32[2,128], index: 1, kind: input, shape index: {}]
  %s2 = inlined_call_operand.hbm [shape: s32[2,128], index: 2, kind: output, shape index: {}]
  %s3 = sld [smem:[#allocation0]]
  $region18: #{tpu_custom_call.1} parent=0
    _
  %s5 = ssub.s32 1, %s3
  %s6 = scalar_select 0, %s5, %s3
  %7 = sst [smem:[#allocation2]] %s0
  $region1: #{tpu_custom_call.1} parent=0
    #allocation3 [shape = 'u8[1024]{0}', space=vmem, size = 0x400, scoped, tag = 'output window, operand 0, single buffered']
    #allocation4 [shape = 's32[1]{0}', space=sflag, size = 0x4, scoped, tag = 'scoped memory for tpu_custom_call.1']
    %8 = vsyncpa [#allocation4], 0
    // Predicated region
    $region2: #{tpu_custom_call.1} parent=1 // pred_check
      _
    $region3: #{tpu_custom_call.1} parent=1 // pred_check_branch
      %10 = sbr.rel (0) target = $region5
    $region4: #{tpu_custom_call.1} parent=1 // pred_region
      _
    $region5: #{tpu_custom_call.1} parent=1 // pred_fallthru
      _
    // Predicated region
    $region6: #{tpu_custom_call.1} parent=1 // pred_check
      _
    $region7: #{tpu_custom_call.1} parent=1 // pred_check_branch
      %12 = sbr.rel (0) target = $region9
    $region8: #{tpu_custom_call.1} parent=1 // pred_region
      _
    $region9: #{tpu_custom_call.1} parent=1 // pred_fallthru
      _
    %v13 = vld [vmem:[%s1] sm:$0x3]
    %v14 = vand.u32 %v13, 15
    %v15 = vmul.u32 %v14, 2
    %s16 = sld [smem:[#allocation2]]
    %v17 = vstv %s16
    %v18 = vshrl.u32 %v17, %v15
    %v19 = vand.u32 %v18, 3
    %20 = vst [vmem:[#allocation3] sm:$0x3] %v19
    // Predicated region
    $region10: #{tpu_custom_call.1} parent=1 // pred_check
      _
    $region11: #{tpu_custom_call.1} parent=1 // pred_check_branch
      %22 = sbr.rel (0) target = $region13
    $region12: #{tpu_custom_call.1} parent=1 // pred_region
      %s24 = ssub.s32 32, 32
      %25 = vsyncadd [#allocation4], %s24
      %s27 = sshll.u32 [#allocation3], 4
      %s28 = int_to_ptr.vmem [resolvable:$true] %s27
      %30 = dma.vmem_to_hbm [thread:$0]  %s28, 32, %s2, [#allocation4]
    $region13: #{tpu_custom_call.1} parent=1 // pred_fallthru
      _
    // Predicated region
    $region14: #{tpu_custom_call.1} parent=1 // pred_check
      _
    $region15: #{tpu_custom_call.1} parent=1 // pred_check_branch
      %32 = sbr.rel (0) target = $region17
    $region16: #{tpu_custom_call.1} parent=1 // pred_region
      %33 = dma.done [#allocation4], 32
    $region17: #{tpu_custom_call.1} parent=1 // pred_fallthru
      _
    %34 = vsyncpa [#allocation4], 1

</llo_original>
